<compile_context>
chip_gen: v5e
topology: v5e:2x2
jax: 0.10.0
libtpu: 0.0.40
codegen_flags: <defaults>
</compile_context>

<pallas_src>
import functools
import math

import jax
import jax.numpy as jnp
from jax import lax
from jax.experimental import pallas as pl
from jax.experimental.pallas import tpu as pltpu


def _round_up(x, m):
    return (x + m - 1) // m * m


def _attnpool_kernel(x_ref, wqkvT_ref, bqkv_ref, wcT_ref, bc_ref,
                     y_ref, attn_ref, qkv_ref, ctx_ref,
                     *, num_heads, seq_len, pad_len, scale):
    """One batch tile (block_b examples) per grid step.

    x_ref:     (block_b*Lp, C)  token rows (Lp = L padded to a sublane multiple)
    wqkvT_ref: (C, 3C)          fused [Wq | Wk | Wv]^T          (grid-invariant)
    bqkv_ref:  (1, 3C)          fused [bq , bk , bv]            (f32)
    wcT_ref:   (C, out_dim)     output projection weight^T      (grid-invariant)
    bc_ref:    (1, out_dim)     output projection bias          (f32)
    y_ref:     (block_b*Lp, out_dim)  pooled-attention output rows
    attn_ref:  (block_b, L, L)        head-averaged attention maps (f32)
    qkv_ref:   (block_b*Lp, 3C) VMEM scratch: fused QKV projection (compute dtype)
    ctx_ref:   (block_b*Lp, C)  VMEM scratch: per-head contexts   (compute dtype)
    """
    BLp, C = x_ref.shape
    L, Lp, H = seq_len, pad_len, num_heads
    B = BLp // Lp
    d = C // H

    # (1) Fused Q/K/V projection: one fat (B*Lp, C) @ (C, 3C) MXU matmul for the
    #     whole batch tile, f32 accumulation, stored to an explicit bf16 scratch.
    qkv = jnp.dot(x_ref[...], wqkvT_ref[...], preferred_element_type=jnp.float32)
    qkv_ref[...] = (qkv + bqkv_ref[...]).astype(qkv_ref.dtype)

    # Keep the (never returned) padded context rows deterministic; they feed the
    # fat output matmul below but the matching y rows are sliced off outside.
    if Lp != L:
        ctx_ref[...] = jnp.zeros_like(ctx_ref)

    # (2) Per-batch-element attention.  fori_loop bounds live ranges across the
    #     batch; heads are batched into single 3-D dots instead of H tiny ones.
    def _per_batch(b, carry):
        row0 = pl.multiple_of(b * Lp, 8)      # Lp % 8 == 0 -> aligned dyn. slice
        rows = pl.ds(row0, L)

        # Three lane-dense (L, C) loads; per-head (L, d) views are value slices.
        q2 = qkv_ref[rows, 0:C]
        k2 = qkv_ref[rows, C:2 * C]
        v2 = qkv_ref[rows, 2 * C:3 * C]
        q = jnp.stack([q2[:, h * d:(h + 1) * d] for h in range(H)])   # (H, L, d)
        k = jnp.stack([k2[:, h * d:(h + 1) * d] for h in range(H)])
        v = jnp.stack([v2[:, h * d:(h + 1) * d] for h in range(H)])

        # Scores for all heads in one batched dot; scale applied to the scores
        # (not folded into the bf16 weight cast) to keep exact reference parity.
        s = jnp.einsum("hqd,hkd->hqk", q, k,
                       preferred_element_type=jnp.float32) * scale     # (H, L, L)
        s = s - jnp.max(s, axis=-1, keepdims=True)
        e = jnp.exp(s)
        p = e / jnp.sum(e, axis=-1, keepdims=True)                     # f32 softmax

        attn_ref[b] = jnp.mean(p, axis=0).astype(attn_ref.dtype)       # head-avg

        ctx = jnp.einsum("hqk,hkd->hqd", p.astype(v.dtype), v,
                         preferred_element_type=jnp.float32)           # (H, L, d)
        # Single lane-dense (L, C) store; no per-head masked partial stores.
        ctx_ref[rows, :] = jnp.concatenate(
            [ctx[h] for h in range(H)], axis=-1).astype(ctx_ref.dtype)
        return carry

    lax.fori_loop(0, B, _per_batch, 0)

    # (3) Output projection: one fat (B*Lp, C) @ (C, out_dim) MXU matmul.
    y = jnp.dot(ctx_ref[...], wcT_ref[...], preferred_element_type=jnp.float32)
    y_ref[...] = (y + bc_ref[...]).astype(y_ref.dtype)


def attention_pool2d(x_nchw, params, num_heads, *, block_b=8,
                     compute_dtype=jnp.bfloat16, out_dtype=jnp.float32,
                     single_buffer_weights=False):
    """Pallas implementation of AttentionPool2d.forward.

    x_nchw: (N, C, H, W)
    returns: (x_out, att_maps)
        x_out:    (L, N, output_dim)  with L = H*W + 1  (PyTorch layout)
        att_maps: (N, L, L)           averaged over heads
    MXU inputs are cast to `compute_dtype` (bf16 by default — mandatory at CLIP
    scale C=2048 on v7x); accumulation, biases and softmax stay in f32.
    Set single_buffer_weights=True (pl.Buffered(1)) to keep only one VMEM copy
    of the grid-invariant weights — needed at CLIP scale on v7x's 64 MiB VMEM.
    """
    N, C, Himg, Wimg = x_nchw.shape
    assert C % num_heads == 0
    HW = Himg * Wimg
    L = HW + 1
    Lp = _round_up(L, 8)
    d = C // num_heads
    scale = 1.0 / math.sqrt(d)

    # ---- prep (plain JAX, f32): flatten spatial, prepend mean token, pos emb.
    # TODO(synk): fuse this prep (and the final (N,L,out)->(L,N,out) transpose)
    # into the kernel to save one HBM round trip of the activations (matters
    # most on v5e's ~0.8 TB/s HBM).
    x = jnp.transpose(x_nchw.reshape(N, C, HW), (0, 2, 1))              # (N, HW, C)
    x = jnp.concatenate([x.mean(axis=1, keepdims=True), x], axis=1)     # (N, L, C)
    x = x + params["pos_emb"][None, :, :].astype(x.dtype)

    # ---- batch tiling: keep >= 2 grid steps when possible so the "parallel"
    #      grid axis has work to shard across v7x's two TensorCores.
    block_b = int(max(1, min(block_b, N)))
    if N > 1 and block_b >= N:
        block_b = -(-N // 2)
    n_tiles = -(-N // block_b)
    n_pad = n_tiles * block_b

    # ---- pad tokens to a sublane multiple and batch to a tile multiple, then
    #      present the activations as a lane-dense 2D slab (rows = batch*token).
    x = jnp.pad(x, ((0, n_pad - N), (0, Lp - L), (0, 0)))
    x2d = x.reshape(n_pad * Lp, C).astype(compute_dtype)

    # ---- fused / cast parameters (scale NOT folded into Wq — see kernel note).
    wqkvT = jnp.concatenate([params["wq"].T, params["wk"].T, params["wv"].T],
                            axis=1).astype(compute_dtype)               # (C, 3C)
    bqkv = jnp.concatenate([params["bq"], params["bk"], params["bv"]]
                           )[None, :].astype(jnp.float32)               # (1, 3C)
    wcT = params["wc"].T.astype(compute_dtype)                          # (C, out)
    bc = params["bc"][None, :].astype(jnp.float32)                      # (1, out)
    out_dim = wcT.shape[1]

    # ---- VMEM budget derived from the actual buffers (pipeline blocks are
    #      double-buffered, scratch is single-copy) with ~30% compiler headroom.
    csz = jnp.dtype(compute_dtype).itemsize
    osz = jnp.dtype(out_dtype).itemsize
    rows = block_b * Lp
    wbuf = 1 if single_buffer_weights else 2
    vmem_needed = (
        2 * rows * C * csz                      # x tile
        + wbuf * C * 3 * C * csz                # fused qkv weight
        + wbuf * C * out_dim * csz              # output projection weight
        + wbuf * (3 * C + out_dim) * 4          # biases
        + 2 * rows * out_dim * osz              # y tile
        + 2 * block_b * L * L * 4               # attention-map tile
        + rows * 3 * C * csz                    # qkv scratch
        + rows * C * csz)                       # ctx scratch
    vmem_limit = int(min(100 * 2**20, max(32 * 2**20, int(vmem_needed * 1.3))))

    kernel = functools.partial(_attnpool_kernel, num_heads=num_heads,
                               seq_len=L, pad_len=Lp, scale=scale)

    def _wspec(shape):
        zero_map = (lambda g: (0, 0))
        if single_buffer_weights:
            # Grid-invariant operands: one VMEM copy is enough (halves the
            # resident weight footprint; needed at CLIP scale on v7x).
            return pl.BlockSpec(shape, zero_map, pipeline_mode=pl.Buffered(1))
        return pl.BlockSpec(shape, zero_map)

    y2d, attn = pl.pallas_call(
        kernel,
        out_shape=(
            jax.ShapeDtypeStruct((n_pad * Lp, out_dim), out_dtype),
            jax.ShapeDtypeStruct((n_pad, L, L), jnp.float32),
        ),
        grid=(n_tiles,),
        in_specs=[
            pl.BlockSpec((rows, C), lambda g: (g, 0)),     # x tile
            _wspec((C, 3 * C)),                            # fused qkv weight
            _wspec((1, 3 * C)),                            # fused qkv bias
            _wspec((C, out_dim)),                          # out-proj weight
            _wspec((1, out_dim)),                          # out-proj bias
        ],
        out_specs=(
            pl.BlockSpec((rows, out_dim), lambda g: (g, 0)),
            pl.BlockSpec((block_b, L, L), lambda g: (g, 0, 0)),
        ),
        scratch_shapes=[
            pltpu.VMEM((rows, 3 * C), compute_dtype),      # qkv projection
            pltpu.VMEM((rows, C), compute_dtype),          # per-head contexts
        ],
        compiler_params=pltpu.CompilerParams(
            dimension_semantics=("parallel",),
            vmem_limit_bytes=vmem_limit),
    )(x2d, wqkvT, bqkv, wcT, bc)

    y = y2d.reshape(n_pad, Lp, out_dim)[:N, :L]
    attn = attn[:N]
    # PyTorch's F.multi_head_attention_forward returns (L, N, out_dim).
    return jnp.transpose(y, (1, 0, 2)), attn


def attention_pool2d_reference(x_nchw, params, num_heads,
                               compute_dtype=jnp.bfloat16):
    """Pure-JAX reference (F.multi_head_attention_forward semantics) using the
    same bf16-MXU-input / f32-accumulate mixed precision as the kernel, so the
    comparison is independent of the backend's default matmul precision."""
    N, C, H, W = x_nchw.shape
    HW = H * W
    L = HW + 1
    d = C // num_heads
    scale = 1.0 / math.sqrt(d)

    x = jnp.transpose(x_nchw.reshape(N, C, HW), (0, 2, 1))
    x = jnp.concatenate([x.mean(axis=1, keepdims=True), x], axis=1)
    x = x + params["pos_emb"][None, :, :]
    xb = x.reshape(N * L, C).astype(compute_dtype)

    def proj(w, b):
        out = jnp.dot(xb, w.T.astype(compute_dtype),
                      preferred_element_type=jnp.float32) + b
        return out.reshape(N, L, C).astype(compute_dtype)

    q = proj(params["wq"], params["bq"])
    k = proj(params["wk"], params["bk"])
    v = proj(params["wv"], params["bv"])

    qh = q.reshape(N, L, num_heads, d).transpose(0, 2, 1, 3)     # (N, H, L, d)
    kh = k.reshape(N, L, num_heads, d).transpose(0, 2, 1, 3)
    vh = v.reshape(N, L, num_heads, d).transpose(0, 2, 1, 3)
    s = jnp.einsum("nhqd,nhkd->nhqk", qh, kh,
                   preferred_element_type=jnp.float32) * scale
    s = s - jnp.max(s, axis=-1, keepdims=True)
    e = jnp.exp(s)
    p = e / jnp.sum(e, axis=-1, keepdims=True)                   # f32 softmax
    ctx = jnp.einsum("nhqk,nhkd->nhqd", p.astype(compute_dtype), vh,
                     preferred_element_type=jnp.float32)
    ctx = ctx.transpose(0, 2, 1, 3).reshape(N * L, C).astype(compute_dtype)
    y = jnp.dot(ctx, params["wc"].T.astype(compute_dtype),
                preferred_element_type=jnp.float32) + params["bc"]
    y = y.reshape(N, L, -1)
    return jnp.transpose(y, (1, 0, 2)), p.mean(axis=1)


def init_params(key, spacial_dim, embed_dim, output_dim):
    L = spacial_dim ** 2 + 1
    ks = jax.random.split(key, 9)
    scale = 1.0 / (embed_dim ** 0.5)
    return {
        "pos_emb": jax.random.normal(ks[0], (L, embed_dim), jnp.float32) * scale,
        "wq": jax.random.normal(ks[1], (embed_dim, embed_dim), jnp.float32) * scale,
        "bq": jax.random.normal(ks[2], (embed_dim,), jnp.float32) * 0.02,
        "wk": jax.random.normal(ks[3], (embed_dim, embed_dim), jnp.float32) * scale,
        "bk": jax.random.normal(ks[4], (embed_dim,), jnp.float32) * 0.02,
        "wv": jax.random.normal(ks[5], (embed_dim, embed_dim), jnp.float32) * scale,
        "bv": jax.random.normal(ks[6], (embed_dim,), jnp.float32) * 0.02,
        "wc": jax.random.normal(ks[7], (output_dim, embed_dim), jnp.float32) * scale,
        "bc": jax.random.normal(ks[8], (output_dim,), jnp.float32) * 0.02,
    }


if __name__ == "__main__":
    # Small, module-consistent shapes: batch=2, embed_dim=32, spatial 4x4 -> L=17.
    batch, embed_dim, spacial_dim, num_heads, output_dim = 2, 32, 4, 4, 32

    key = jax.random.PRNGKey(0)
    k_x, k_p = jax.random.split(key)
    x = jax.random.normal(k_x, (batch, embed_dim, spacial_dim, spacial_dim),
                          jnp.float32)
    params = init_params(k_p, spacial_dim, embed_dim, output_dim)

    y, att_maps = attention_pool2d(x, params, num_heads)
    y = jax.block_until_ready(y)
    att_maps = jax.block_until_ready(att_maps)

    y_ref, att_ref = attention_pool2d_reference(x, params, num_heads)
    L = spacial_dim ** 2 + 1
    assert y.shape == (L, batch, output_dim)
    assert att_maps.shape == (batch, L, L)
    # Kernel and reference share the same bf16-input/f32-accumulate casts, so
    # the remaining difference is accumulation order and the hardware
    # exp/softmax path (~1e-4 scale); 5e-3 leaves a wide safety margin.
    assert jnp.allclose(y, y_ref, atol=5e-3, rtol=5e-3)
    assert jnp.allclose(att_maps, att_ref, atol=5e-3, rtol=5e-3)

    print("KERNEL_OK")
</pallas_src>

<mosaic_0001>
module attributes {stable_mosaic.version = 11 : i64} {
  func.func @_attnpool_kernel(%arg0: i32, %arg1: memref<24x32xbf16, #tpu.memory_space<vmem>>, %arg2: memref<32x96xbf16, #tpu.memory_space<vmem>>, %arg3: memref<1x96xf32, #tpu.memory_space<vmem>>, %arg4: memref<32x32xbf16, #tpu.memory_space<vmem>>, %arg5: memref<1x32xf32, #tpu.memory_space<vmem>>, %arg6: memref<24x32xf32, #tpu.memory_space<vmem>>, %arg7: memref<1x17x17xf32, #tpu.memory_space<vmem>>, %arg8: memref<24x96xbf16, #tpu.memory_space<vmem>>, %arg9: memref<24x32xbf16, #tpu.memory_space<vmem>>) attributes {dimension_semantics = [#tpu.dimension_semantics<parallel>], iteration_bounds = array<i64: 2>, scalar_prefetch = 0 : i64, scratch_operands = 2 : i64, tpu.core_type = #tpu.core_type<tc>, window_params = [{transform_indices = @transform_0, window_bounds = array<i64: 24, 32>}, {pipeline_mode = #tpu.pipeline_mode<synchronous>, transform_indices = @transform_1, window_bounds = array<i64: 32, 96>}, {pipeline_mode = #tpu.pipeline_mode<synchronous>, transform_indices = @transform_2, window_bounds = array<i64: 1, 96>}, {pipeline_mode = #tpu.pipeline_mode<synchronous>, transform_indices = @transform_3, window_bounds = array<i64: 32, 32>}, {pipeline_mode = #tpu.pipeline_mode<synchronous>, transform_indices = @transform_4, window_bounds = array<i64: 1, 32>}, {transform_indices = @transform_5, window_bounds = array<i64: 24, 32>}, {transform_indices = @transform_6, window_bounds = array<i64: 1, 17, 17>}]} {
    %c0 = arith.constant 0 : index
    %c0_0 = arith.constant 0 : index
    %0 = vector.load %arg1[%c0, %c0_0] : memref<24x32xbf16, #tpu.memory_space<vmem>>, vector<24x32xbf16>
    %c0_1 = arith.constant 0 : index
    %c0_2 = arith.constant 0 : index
    %1 = vector.load %arg2[%c0_1, %c0_2] : memref<32x96xbf16, #tpu.memory_space<vmem>>, vector<32x96xbf16>
    %cst = arith.constant dense<0.000000e+00> : vector<24x96xf32>
    %2 = tpu.matmul %0, %1, %cst {dimension_numbers = #tpu.dot_dimension_numbers<[1], [0], [0], [1], [0, 0, 1, 1], [], []>} : vector<24x32xbf16>, vector<32x96xbf16>, vector<24x96xf32> -> vector<24x96xf32>
    %c0_3 = arith.constant 0 : index
    %c0_4 = arith.constant 0 : index
    %3 = vector.load %arg3[%c0_3, %c0_4] : memref<1x96xf32, #tpu.memory_space<vmem>>, vector<1x96xf32>
    %4 = vector.broadcast %3 : vector<1x96xf32> to vector<24x96xf32>
    %5 = arith.addf %2, %4 : vector<24x96xf32>
    %6 = arith.truncf %5 : vector<24x96xf32> to vector<24x96xbf16>
    %c0_5 = arith.constant 0 : index
    %c0_6 = arith.constant 0 : index
    %7 = vector.load %arg8[%c0_5, %c0_6] : memref<24x96xbf16, #tpu.memory_space<vmem>>, vector<24x96xbf16>
    tpu.vector_store %arg8[%c0_5, %c0_6], %6 {strides = array<i32>} : memref<24x96xbf16, #tpu.memory_space<vmem>>, vector<24x96xbf16>,
    %cst_7 = arith.constant 0.000000e+00 : bf16
    %8 = vector.broadcast %cst_7 : bf16 to vector<24x32xbf16>
    %c0_8 = arith.constant 0 : index
    %c0_9 = arith.constant 0 : index
    %9 = vector.load %arg9[%c0_8, %c0_9] : memref<24x32xbf16, #tpu.memory_space<vmem>>, vector<24x32xbf16>
    tpu.vector_store %arg9[%c0_8, %c0_9], %8 {strides = array<i32>} : memref<24x32xbf16, #tpu.memory_space<vmem>>, vector<24x32xbf16>,
    %c0_i32 = arith.constant 0 : i32
    %c24_i32 = arith.constant 24 : i32
    %10 = arith.muli %c0_i32, %c24_i32 : i32
    %11 = tpu.assume_multiple %10, 8 : i32
    %12 = arith.index_cast %11 : i32 to index
    %c0_10 = arith.constant 0 : index
    %13 = vector.load %arg8[%12, %c0_10] : memref<24x96xbf16, #tpu.memory_space<vmem>>, vector<17x32xbf16>
    %14 = arith.index_cast %11 : i32 to index
    %c32 = arith.constant 32 : index
    %15 = vector.load %arg8[%14, %c32] : memref<24x96xbf16, #tpu.memory_space<vmem>>, vector<17x32xbf16>
    %16 = arith.index_cast %11 : i32 to index
    %c64 = arith.constant 64 : index
    %17 = vector.load %arg8[%16, %c64] : memref<24x96xbf16, #tpu.memory_space<vmem>>, vector<17x32xbf16>
    %18 = vector.extract_strided_slice %13 {offsets = [0, 0], sizes = [17, 8], strides = [1, 1]} : vector<17x32xbf16> to vector<17x8xbf16>
    %19 = vector.extract_strided_slice %13 {offsets = [0, 8], sizes = [17, 8], strides = [1, 1]} : vector<17x32xbf16> to vector<17x8xbf16>
    %20 = vector.extract_strided_slice %13 {offsets = [0, 16], sizes = [17, 8], strides = [1, 1]} : vector<17x32xbf16> to vector<17x8xbf16>
    %21 = vector.extract_strided_slice %13 {offsets = [0, 24], sizes = [17, 8], strides = [1, 1]} : vector<17x32xbf16> to vector<17x8xbf16>
    %22 = vector.shape_cast %18 : vector<17x8xbf16> to vector<1x17x8xbf16>
    %23 = vector.shape_cast %19 : vector<17x8xbf16> to vector<1x17x8xbf16>
    %24 = vector.shape_cast %20 : vector<17x8xbf16> to vector<1x17x8xbf16>
    %25 = vector.shape_cast %21 : vector<17x8xbf16> to vector<1x17x8xbf16>
    %26 = tpu.concatenate %22, %23, %24, %25 in 0 : vector<1x17x8xbf16>, vector<1x17x8xbf16>, vector<1x17x8xbf16>, vector<1x17x8xbf16> -> vector<4x17x8xbf16>
    %27 = vector.extract_strided_slice %15 {offsets = [0, 0], sizes = [17, 8], strides = [1, 1]} : vector<17x32xbf16> to vector<17x8xbf16>
    %28 = vector.extract_strided_slice %15 {offsets = [0, 8], sizes = [17, 8], strides = [1, 1]} : vector<17x32xbf16> to vector<17x8xbf16>
    %29 = vector.extract_strided_slice %15 {offsets = [0, 16], sizes = [17, 8], strides = [1, 1]} : vector<17x32xbf16> to vector<17x8xbf16>
    %30 = vector.extract_strided_slice %15 {offsets = [0, 24], sizes = [17, 8], strides = [1, 1]} : vector<17x32xbf16> to vector<17x8xbf16>
    %31 = vector.shape_cast %27 : vector<17x8xbf16> to vector<1x17x8xbf16>
    %32 = vector.shape_cast %28 : vector<17x8xbf16> to vector<1x17x8xbf16>
    %33 = vector.shape_cast %29 : vector<17x8xbf16> to vector<1x17x8xbf16>
    %34 = vector.shape_cast %30 : vector<17x8xbf16> to vector<1x17x8xbf16>
    %35 = tpu.concatenate %31, %32, %33, %34 in 0 : vector<1x17x8xbf16>, vector<1x17x8xbf16>, vector<1x17x8xbf16>, vector<1x17x8xbf16> -> vector<4x17x8xbf16>
    %36 = vector.extract_strided_slice %17 {offsets = [0, 0], sizes = [17, 8], strides = [1, 1]} : vector<17x32xbf16> to vector<17x8xbf16>
    %37 = vector.extract_strided_slice %17 {offsets = [0, 8], sizes = [17, 8], strides = [1, 1]} : vector<17x32xbf16> to vector<17x8xbf16>
    %38 = vector.extract_strided_slice %17 {offsets = [0, 16], sizes = [17, 8], strides = [1, 1]} : vector<17x32xbf16> to vector<17x8xbf16>
    %39 = vector.extract_strided_slice %17 {offsets = [0, 24], sizes = [17, 8], strides = [1, 1]} : vector<17x32xbf16> to vector<17x8xbf16>
    %40 = vector.shape_cast %36 : vector<17x8xbf16> to vector<1x17x8xbf16>
    %41 = vector.shape_cast %37 : vector<17x8xbf16> to vector<1x17x8xbf16>
    %42 = vector.shape_cast %38 : vector<17x8xbf16> to vector<1x17x8xbf16>
    %43 = vector.shape_cast %39 : vector<17x8xbf16> to vector<1x17x8xbf16>
    %44 = tpu.concatenate %40, %41, %42, %43 in 0 : vector<1x17x8xbf16>, vector<1x17x8xbf16>, vector<1x17x8xbf16>, vector<1x17x8xbf16> -> vector<4x17x8xbf16>
    "tpu.trace_start"() <{level = 10 : i32, message = "hqd,hkd->hqk"}> : () -> ()
    %cst_11 = arith.constant dense<0.000000e+00> : vector<4x17x17xf32>
    %45 = tpu.matmul %26, %35, %cst_11 {dimension_numbers = #tpu.dot_dimension_numbers<[2], [2], [1], [1], [0, 0, 0, 1, 1, 1], [0], [0]>} : vector<4x17x8xbf16>, vector<4x17x8xbf16>, vector<4x17x17xf32> -> vector<4x17x17xf32>
    "tpu.trace_stop"() : () -> ()
    %cst_12 = arith.constant 0.353553385 : f32
    %46 = vector.broadcast %cst_12 : f32 to vector<4x17x17xf32>
    %47 = arith.mulf %45, %46 : vector<4x17x17xf32>
    %cst_13 = arith.constant dense<0xFF800000> : vector<4x17xf32>
    %48 = vector.multi_reduction <maximumf>, %47, %cst_13 [2] : vector<4x17x17xf32> to vector<4x17xf32>
    %49 = vector.shape_cast %48 : vector<4x17xf32> to vector<4x17x1xf32>
    %50 = vector.broadcast %49 : vector<4x17x1xf32> to vector<4x17x17xf32>
    %51 = arith.subf %47, %50 : vector<4x17x17xf32>
    %52 = math.exp %51 : vector<4x17x17xf32>
    %cst_14 = arith.constant dense<0.000000e+00> : vector<4x17xf32>
    %53 = vector.multi_reduction <add>, %52, %cst_14 [2] : vector<4x17x17xf32> to vector<4x17xf32>
    %54 = vector.shape_cast %53 : vector<4x17xf32> to vector<4x17x1xf32>
    %55 = vector.broadcast %54 : vector<4x17x1xf32> to vector<4x17x17xf32>
    %56 = arith.divf %52, %55 : vector<4x17x17xf32>
    %cst_15 = arith.constant dense<0.000000e+00> : vector<17x17xf32>
    %57 = vector.multi_reduction <add>, %56, %cst_15 [0] : vector<4x17x17xf32> to vector<17x17xf32>
    %cst_16 = arith.constant 4.000000e+00 : f32
    %58 = vector.broadcast %cst_16 : f32 to vector<17x17xf32>
    %59 = arith.divf %57, %58 : vector<17x17xf32>
    %60 = arith.index_cast %c0_i32 : i32 to index
    %c0_17 = arith.constant 0 : index
    %c0_18 = arith.constant 0 : index
    %61 = vector.load %arg7[%60, %c0_17, %c0_18] : memref<1x17x17xf32, #tpu.memory_space<vmem>>, vector<1x17x17xf32>
    %62 = vector.shape_cast %61 : vector<1x17x17xf32> to vector<17x17xf32>
    %63 = vector.shape_cast %59 : vector<17x17xf32> to vector<1x17x17xf32>
    tpu.vector_store %arg7[%60, %c0_17, %c0_18], %63 {strides = array<i32>} : memref<1x17x17xf32, #tpu.memory_space<vmem>>, vector<1x17x17xf32>,
    %64 = arith.truncf %56 : vector<4x17x17xf32> to vector<4x17x17xbf16>
    "tpu.trace_start"() <{level = 10 : i32, message = "hqk,hkd->hqd"}> : () -> ()
    %cst_19 = arith.constant dense<0.000000e+00> : vector<4x17x8xf32>
    %65 = tpu.matmul %64, %44, %cst_19 {dimension_numbers = #tpu.dot_dimension_numbers<[2], [1], [1], [2], [0, 0, 0, 1, 1, 2], [0], [0]>} : vector<4x17x17xbf16>, vector<4x17x8xbf16>, vector<4x17x8xf32> -> vector<4x17x8xf32>
    "tpu.trace_stop"() : () -> ()
    %66 = vector.extract_strided_slice %65 {offsets = [0, 0, 0], sizes = [1, 17, 8], strides = [1, 1, 1]} : vector<4x17x8xf32> to vector<1x17x8xf32>
    %67 = vector.shape_cast %66 : vector<1x17x8xf32> to vector<17x8xf32>
    %68 = vector.extract_strided_slice %65 {offsets = [1, 0, 0], sizes = [1, 17, 8], strides = [1, 1, 1]} : vector<4x17x8xf32> to vector<1x17x8xf32>
    %69 = vector.shape_cast %68 : vector<1x17x8xf32> to vector<17x8xf32>
    %70 = vector.extract_strided_slice %65 {offsets = [2, 0, 0], sizes = [1, 17, 8], strides = [1, 1, 1]} : vector<4x17x8xf32> to vector<1x17x8xf32>
    %71 = vector.shape_cast %70 : vector<1x17x8xf32> to vector<17x8xf32>
    %72 = vector.extract_strided_slice %65 {offsets = [3, 0, 0], sizes = [1, 17, 8], strides = [1, 1, 1]} : vector<4x17x8xf32> to vector<1x17x8xf32>
    %73 = vector.shape_cast %72 : vector<1x17x8xf32> to vector<17x8xf32>
    %74 = tpu.concatenate %67, %69, %71, %73 in 1 : vector<17x8xf32>, vector<17x8xf32>, vector<17x8xf32>, vector<17x8xf32> -> vector<17x32xf32>
    %75 = arith.truncf %74 : vector<17x32xf32> to vector<17x32xbf16>
    %76 = arith.index_cast %11 : i32 to index
    %c0_20 = arith.constant 0 : index
    %77 = vector.load %arg9[%76, %c0_20] : memref<24x32xbf16, #tpu.memory_space<vmem>>, vector<17x32xbf16>
    tpu.vector_store %arg9[%76, %c0_20], %75 {strides = array<i32>} : memref<24x32xbf16, #tpu.memory_space<vmem>>, vector<17x32xbf16>,
    %c1_i32 = arith.constant 1 : i32
    %c0_21 = arith.constant 0 : index
    %c0_22 = arith.constant 0 : index
    %78 = vector.load %arg9[%c0_21, %c0_22] : memref<24x32xbf16, #tpu.memory_space<vmem>>, vector<24x32xbf16>
    %c0_23 = arith.constant 0 : index
    %c0_24 = arith.constant 0 : index
    %79 = vector.load %arg4[%c0_23, %c0_24] : memref<32x32xbf16, #tpu.memory_space<vmem>>, vector<32x32xbf16>
    %cst_25 = arith.constant dense<0.000000e+00> : vector<24x32xf32>
    %80 = tpu.matmul %78, %79, %cst_25 {dimension_numbers = #tpu.dot_dimension_numbers<[1], [0], [0], [1], [0, 0, 1, 1], [], []>} : vector<24x32xbf16>, vector<32x32xbf16>, vector<24x32xf32> -> vector<24x32xf32>
    %c0_26 = arith.constant 0 : index
    %c0_27 = arith.constant 0 : index
    %81 = vector.load %arg5[%c0_26, %c0_27] : memref<1x32xf32, #tpu.memory_space<vmem>>, vector<1x32xf32>
    %82 = vector.broadcast %81 : vector<1x32xf32> to vector<24x32xf32>
    %83 = arith.addf %80, %82 : vector<24x32xf32>
    %c0_28 = arith.constant 0 : index
    %c0_29 = arith.constant 0 : index
    %84 = vector.load %arg6[%c0_28, %c0_29] : memref<24x32xf32, #tpu.memory_space<vmem>>, vector<24x32xf32>
    tpu.vector_store %arg6[%c0_28, %c0_29], %83 {strides = array<i32>} : memref<24x32xf32, #tpu.memory_space<vmem>>, vector<24x32xf32>,
    return
  }
  func.func @transform_0(%arg0: i32) -> (i32, i32) {
    %c0_i32 = arith.constant 0 : i32
    %c0_i32_0 = arith.constant 0 : i32
    return %arg0, %c0_i32 : i32, i32
  }
  func.func @transform_1(%arg0: i32) -> (i32, i32) {
    %c0_i32 = arith.constant 0 : i32
    %c0_i32_0 = arith.constant 0 : i32
    %c0_i32_1 = arith.constant 0 : i32
    return %c0_i32, %c0_i32_0 : i32, i32
  }
  func.func @transform_2(%arg0: i32) -> (i32, i32) {
    %c0_i32 = arith.constant 0 : i32
    %c0_i32_0 = arith.constant 0 : i32
    %c0_i32_1 = arith.constant 0 : i32
    return %c0_i32, %c0_i32_0 : i32, i32
  }
  func.func @transform_3(%arg0: i32) -> (i32, i32) {
    %c0_i32 = arith.constant 0 : i32
    %c0_i32_0 = arith.constant 0 : i32
    %c0_i32_1 = arith.constant 0 : i32
    return %c0_i32, %c0_i32_0 : i32, i32
  }
  func.func @transform_4(%arg0: i32) -> (i32, i32) {
    %c0_i32 = arith.constant 0 : i32
    %c0_i32_0 = arith.constant 0 : i32
    %c0_i32_1 = arith.constant 0 : i32
    return %c0_i32, %c0_i32_0 : i32, i32
  }
  func.func @transform_5(%arg0: i32) -> (i32, i32) {
    %c0_i32 = arith.constant 0 : i32
    %c0_i32_0 = arith.constant 0 : i32
    return %arg0, %c0_i32 : i32, i32
  }
  func.func @transform_6(%arg0: i32) -> (i32, i32, i32) {
    %c0_i32 = arith.constant 0 : i32
    %c0_i32_0 = arith.constant 0 : i32
    %c0_i32_1 = arith.constant 0 : i32
    return %arg0, %c0_i32, %c0_i32_0 : i32, i32, i32
  }
}

</mosaic_0001>

<llo_original>
// kernel: tpu_custom_call.1
$region0: #{tpu_custom_call.1}
  #allocation0 [shape = 'u32[]', space=smem, size = 0x4, offset = 0x4, fixed_abs, tag = 'smem constant byte address 0x4 - core index']
  #allocation1 [shape = 'u32[72,128]{1,0:T(1,128)}', space=vmem, size = 0x9000, scoped, tag = 'internal scratch']
  #allocation2 [shape = 'bf16[24,96]{1,0:T(8,128)(2,1)}', space=vmem, size = 0x1800, scoped, tag = 'scratch operand']
  #allocation3 [shape = 'bf16[24,32]{1,0:T(8,128)(2,1)}', space=vmem, size = 0x1800, scoped, tag = 'scratch operand']
  %s0 = inlined_call_operand.vmem [shape: bf16[48,32], index: 0, kind: input, shape index: {}]
  %s1 = inlined_call_operand.vmem [shape: bf16[32,96], index: 1, kind: input, shape index: {}]
  %s2 = inlined_call_operand.vmem [shape: f32[1,96], index: 2, kind: input, shape index: {}]
  %s3 = inlined_call_operand.vmem [shape: bf16[32,32], index: 3, kind: input, shape index: {}]
  %s4 = inlined_call_operand.vmem [shape: f32[1,32], index: 4, kind: input, shape index: {}]
  %s5 = inlined_call_operand.vmem [shape: f32[48,32], index: 5, kind: output, shape index: {0}]
  %s6 = inlined_call_operand.vmem [shape: f32[2,17,17], index: 6, kind: output, shape index: {1}]
  %7 = xla_tuple %s5, %s6
  %s8 = sld [smem:[#allocation0]]
  $region61: #{tpu_custom_call.1} parent=0
    _
  %s10 = ssub.s32 1, %s8
  %s11 = scalar_select 0, %s10, %s8
  loop: start=0, step=1, limit=4
  $region2: #{tpu_custom_call.1} parent=0 // loop_pre_header
    _
  $region3: #{tpu_custom_call.1} parent=0 // loop_header
    %s13 = sphi 0, %s17
    %p14 = scmp.ge.s32.totalorder %s13, 4
    %s23 = sphi 0, %s25
    %s26 = sphi 0, %s23
    %s27 = sphi 0, %s26
    %s43 = sphi 0, %s27
    %s47 = sphi 0, %s47
    %s49 = sphi 0, %s47
    %s50 = sphi 0, %s49
    %s64 = sphi 0, %s50
    %s68 = sphi 0, %s68
    %s70 = sphi 0, %s68
    %s71 = sphi 0, %s70
    %s85 = sphi 0, %s71
    %s89 = sphi 0, %s89
    %s91 = sphi 0, %s89
    %s92 = sphi 0, %s91
    %s106 = sphi 0, %s92
    %s110 = sphi 0, %s110
    %s112 = sphi 0, %s110
    %s113 = sphi 0, %s112
    %s127 = sphi 0, %s113
    %s133 = sphi 0, %s135
    %s136 = sphi 0, %s133
    %s137 = sphi 0, %s136
    %s153 = sphi 0, %s137
    %s159 = sphi 0, %s161
    %s162 = sphi 0, %s159
    %s163 = sphi 0, %s162
    %s179 = sphi 0, %s163
  $region4: #{tpu_custom_call.1} parent=0 // loop_header_branch
    %16 = sbr.rel (%p14) target = $region8
  $region5: #{tpu_custom_call.1} parent=0 // loop_body
    %s18 = ssub.s32 %s13, 1
    %s19 = ssub.s32 %s13, 2
    %s20 = sadd.s32 %s13, 1
    %s21 = ssub.s32 %s13, %s20
    %p22 = scmp.eq.s32.totalorder %s21, 0
    %s24 = sadd.s32 %s23, 1
    %s25 = scalar_select %p22, %s23, %s24
    %p28 = pneg %p22
    %p29 = scmp.eq.s32.totalorder %s13, 1
    %p30 = por %p28, %p29
    %p31 = scmp.ne.s32.totalorder %s23, %s26
    %p32 = scmp.eq.s32.totalorder %s13, 0
    %p33 = por %p31, %p32
    %p34 = scmp.ne.s32.totalorder %s23, %s26
    %p35 = scmp.eq.s32.totalorder %s18, 1
    %p36 = por %p34, %p35
    %p37 = scmp.ne.s32.totalorder %s26, %s27
    %p38 = scmp.eq.s32.totalorder %s18, 0
    %p39 = por %p37, %p38
    %p40 = scmp.ne.s32.totalorder %s26, %s27
    %p41 = scmp.eq.s32.totalorder %s19, 1
    %p42 = por %p40, %p41
    %p44 = scmp.ne.s32.totalorder %s27, %s43
    %p45 = scmp.eq.s32.totalorder %s19, 0
    %p46 = por %p44, %p45
    %s48 = sadd.s32 %s47, 1
    %p51 = scmp.eq.s32.totalorder %s13, 1
    %p52 = scmp.ne.s32.totalorder %s47, %s49
    %p53 = scmp.eq.s32.totalorder %s13, 0
    %p54 = por %p52, %p53
    %p55 = scmp.ne.s32.totalorder %s47, %s49
    %p56 = scmp.eq.s32.totalorder %s18, 1
    %p57 = por %p55, %p56
    %p58 = scmp.ne.s32.totalorder %s49, %s50
    %p59 = scmp.eq.s32.totalorder %s18, 0
    %p60 = por %p58, %p59
    %p61 = scmp.ne.s32.totalorder %s49, %s50
    %p62 = scmp.eq.s32.totalorder %s19, 1
    %p63 = por %p61, %p62
    %p65 = scmp.ne.s32.totalorder %s50, %s64
    %p66 = scmp.eq.s32.totalorder %s19, 0
    %p67 = por %p65, %p66
    %s69 = sadd.s32 %s68, 1
    %p72 = scmp.eq.s32.totalorder %s13, 1
    %p73 = scmp.ne.s32.totalorder %s68, %s70
    %p74 = scmp.eq.s32.totalorder %s13, 0
    %p75 = por %p73, %p74
    %p76 = scmp.ne.s32.totalorder %s68, %s70
    %p77 = scmp.eq.s32.totalorder %s18, 1
    %p78 = por %p76, %p77
    %p79 = scmp.ne.s32.totalorder %s70, %s71
    %p80 = scmp.eq.s32.totalorder %s18, 0
    %p81 = por %p79, %p80
    %p82 = scmp.ne.s32.totalorder %s70, %s71
    %p83 = scmp.eq.s32.totalorder %s19, 1
    %p84 = por %p82, %p83
    %p86 = scmp.ne.s32.totalorder %s71, %s85
    %p87 = scmp.eq.s32.totalorder %s19, 0
    %p88 = por %p86, %p87
    %s90 = sadd.s32 %s89, 1
    %p93 = scmp.eq.s32.totalorder %s13, 1
    %p94 = scmp.ne.s32.totalorder %s89, %s91
    %p95 = scmp.eq.s32.totalorder %s13, 0
    %p96 = por %p94, %p95
    %p97 = scmp.ne.s32.totalorder %s89, %s91
    %p98 = scmp.eq.s32.totalorder %s18, 1
    %p99 = por %p97, %p98
    %p100 = scmp.ne.s32.totalorder %s91, %s92
    %p101 = scmp.eq.s32.totalorder %s18, 0
    %p102 = por %p100, %p101
    %p103 = scmp.ne.s32.totalorder %s91, %s92
    %p104 = scmp.eq.s32.totalorder %s19, 1
    %p105 = por %p103, %p104
    %p107 = scmp.ne.s32.totalorder %s92, %s106
    %p108 = scmp.eq.s32.totalorder %s19, 0
    %p109 = por %p107, %p108
    %s111 = sadd.s32 %s110, 1
    %p114 = scmp.eq.s32.totalorder %s13, 1
    %p115 = scmp.ne.s32.totalorder %s110, %s112
    %p116 = scmp.eq.s32.totalorder %s13, 0
    %p117 = por %p115, %p116
    %p118 = scmp.ne.s32.totalorder %s110, %s112
    %p119 = scmp.eq.s32.totalorder %s18, 1
    %p120 = por %p118, %p119
    %p121 = scmp.ne.s32.totalorder %s112, %s113
    %p122 = scmp.eq.s32.totalorder %s18, 0
    %p123 = por %p121, %p122
    %p124 = scmp.ne.s32.totalorder %s112, %s113
    %p125 = scmp.eq.s32.totalorder %s19, 1
    %p126 = por %p124, %p125
    %p128 = scmp.ne.s32.totalorder %s113, %s127
    %p129 = scmp.eq.s32.totalorder %s19, 0
    %p130 = por %p128, %p129
    %s131 = ssub.s32 %s13, %s20
    %p132 = scmp.eq.s32.totalorder %s131, 0
    %s134 = sadd.s32 %s133, 1
    %s135 = scalar_select %p132, %s133, %s134
    %p138 = pneg %p132
    %p139 = scmp.eq.s32.totalorder %s13, 1
    %p140 = por %p138, %p139
    %p141 = scmp.ne.s32.totalorder %s133, %s136
    %p142 = scmp.eq.s32.totalorder %s13, 0
    %p143 = por %p141, %p142
    %p144 = scmp.ne.s32.totalorder %s133, %s136
    %p145 = scmp.eq.s32.totalorder %s18, 1
    %p146 = por %p144, %p145
    %p147 = scmp.ne.s32.totalorder %s136, %s137
    %p148 = scmp.eq.s32.totalorder %s18, 0
    %p149 = por %p147, %p148
    %p150 = scmp.ne.s32.totalorder %s136, %s137
    %p151 = scmp.eq.s32.totalorder %s19, 1
    %p152 = por %p150, %p151
    %p154 = scmp.ne.s32.totalorder %s137, %s153
    %p155 = scmp.eq.s32.totalorder %s19, 0
    %p156 = por %p154, %p155
    %s157 = ssub.s32 %s13, %s20
    %p158 = scmp.eq.s32.totalorder %s157, 0
    %s160 = sadd.s32 %s159, 1
    %s161 = scalar_select %p158, %s159, %s160
    %p164 = pneg %p158
    %p165 = scmp.eq.s32.totalorder %s13, 1
    %p166 = por %p164, %p165
    %p167 = scmp.ne.s32.totalorder %s159, %s162
    %p168 = scmp.eq.s32.totalorder %s13, 0
    %p169 = por %p167, %p168
    %p170 = scmp.ne.s32.totalorder %s159, %s162
    %p171 = scmp.eq.s32.totalorder %s18, 1
    %p172 = por %p170, %p171
    %p173 = scmp.ne.s32.totalorder %s162, %s163
    %p174 = scmp.eq.s32.totalorder %s18, 0
    %p175 = por %p173, %p174
    %p176 = scmp.ne.s32.totalorder %s162, %s163
    %p177 = scmp.eq.s32.totalorder %s19, 1
    %p178 = por %p176, %p177
    %p180 = scmp.ne.s32.totalorder %s163, %s179
    %p181 = scmp.eq.s32.totalorder %s19, 0
    %p182 = por %p180, %p181
    %p183 = scmp.le.s32.totalorder 1, %s13
    %p184 = scmp.lt.s32.totalorder %s13, 3
    %p185 = pnand %p183, %p184
    %p186 = pneg %p185
    // Predicated region
    $region9: #{tpu_custom_call.1} parent=5 // pred_check
      _
    $region10: #{tpu_custom_call.1} parent=5 // pred_check_branch
      %188 = sbr.rel (%p185) target = $region12
    $region11: #{tpu_custom_call.1} parent=5 // pred_region
      %s189 = ssub.s32 %s13, 1
      // Predicated region
      $region13: #{tpu_custom_call.1} parent=11 // pred_check
        %p190 = pneg %p60
      $region14: #{tpu_custom_call.1} parent=11 // pred_check_branch
        %192 = sbr.rel (%p190) target = $region16
      $region15: #{tpu_custom_call.1} parent=11 // pred_region
        _
      $region16: #{tpu_custom_call.1} parent=11 // pred_fallthru
        _
      // Predicated region
      $region17: #{tpu_custom_call.1} parent=11 // pred_check
        %p193 = pneg %p81
      $region18: #{tpu_custom_call.1} parent=11 // pred_check_branch
        %195 = sbr.rel (%p193) target = $region20
      $region19: #{tpu_custom_call.1} parent=11 // pred_region
        _
      $region20: #{tpu_custom_call.1} parent=11 // pred_fallthru
        _
      // Predicated region
      $region21: #{tpu_custom_call.1} parent=11 // pred_check
        %p196 = pneg %p102
      $region22: #{tpu_custom_call.1} parent=11 // pred_check_branch
        %198 = sbr.rel (%p196) target = $region24
      $region23: #{tpu_custom_call.1} parent=11 // pred_region
        _
      $region24: #{tpu_custom_call.1} parent=11 // pred_fallthru
        _
      // Predicated region
      $region25: #{tpu_custom_call.1} parent=11 // pred_check
        %p199 = pneg %p123
      $region26: #{tpu_custom_call.1} parent=11 // pred_check_branch
        %201 = sbr.rel (%p199) target = $region28
      $region27: #{tpu_custom_call.1} parent=11 // pred_region
        _
      $region28: #{tpu_custom_call.1} parent=11 // pred_fallthru
        _
    $region12: #{tpu_custom_call.1} parent=5 // pred_fallthru
      _
    %p202 = scmp.lt.s32.totalorder %s13, 2
    // Predicated region
    $region29: #{tpu_custom_call.1} parent=5 // pred_check
      %p203 = pneg %p202
    $region30: #{tpu_custom_call.1} parent=5 // pred_check_branch
      %205 = sbr.rel (%p203) target = $region32
    $region31: #{tpu_custom_call.1} parent=5 // pred_region
      // Predicated region
      $region33: #{tpu_custom_call.1} parent=31 // pred_check
        %p206 = pneg %p33
      $region34: #{tpu_custom_call.1} parent=31 // pred_check_branch
        %208 = sbr.rel (%p206) target = $region36
      $region35: #{tpu_custom_call.1} parent=31 // pred_region
        %s209 = smul.u32 3, %s13
        %p210 = scmp.lt.s32.totalorder %s209, 5
        %s211 = scalar_select %p210, %s209, 5
        %s212 = smul.addr %s211, 4
        %s213 = scalar_lea.vmem %s0, %s212
        %s214 = smul.u32 3, %s13
      $region36: #{tpu_custom_call.1} parent=31 // pred_fallthru
        _
    $region32: #{tpu_custom_call.1} parent=5 // pred_fallthru
      _
    %p215 = scmp.le.s32.totalorder 1, %s13
    %p216 = scmp.lt.s32.totalorder %s13, 3
    %p217 = pnand %p215, %p216
    %p218 = pneg %p217
    // Predicated region
    $region37: #{tpu_custom_call.1} parent=5 // pred_check
      _
    $region38: #{tpu_custom_call.1} parent=5 // pred_check_branch
      %220 = sbr.rel (%p217) target = $region40
    $region39: #{tpu_custom_call.1} parent=5 // pred_region
      %s221 = ssub.s32 %s13, 1
      %s222 = smul.u32 3, %s18
      %p223 = scmp.lt.s32.totalorder %s222, 5
      %s224 = scalar_select %p223, %s222, 5
      %s225 = smul.addr %s224, 4
      %s226 = scalar_lea.vmem %s0, %s225
      %p227 = pneg %p39
      %p228 = pneg %p36
      %p229 = pneg %p60
      %p230 = pneg %p57
      %p231 = pneg %p81
      %p232 = pneg %p78
      %p233 = pneg %p102
      %p234 = pneg %p99
      %p235 = pneg %p123
      %p236 = pneg %p120
      %p237 = pneg %p149
      %p238 = pneg %p146
      %s239 = smul.u32 3, %s18
      %p240 = scmp.lt.s32.totalorder %s239, 5
      %s241 = scalar_select %p240, %s239, 5
      %s242 = smul.addr %s241, 8
      %s243 = scalar_lea.vmem %s5, %s242
      %p244 = pneg %p175
      %p245 = pneg %p172
      %p246 = scmp.lt.s32.totalorder %s18, 1
      %s247 = scalar_select %p246, %s18, 1
      %s248 = smul.addr %s247, 3
      %s249 = smul.addr %s248, 8
      %s250 = scalar_lea.vmem %s6, %s249
      %s251 = smul.u32 3, %s18
      %p252 = scmp.lt.s32.totalorder %s251, 5
      %s253 = scalar_select %p252, %s251, 5
      %s254 = smul.addr %s253, 4
      %s255 = scalar_lea.vmem %s0, %s254
      %s256 = smul.u32 3, %s18
      %s257 = smul.u32 3, %s18
      %p258 = scmp.lt.s32.totalorder %s257, 5
      %s259 = scalar_select %p258, %s257, 5
      %s260 = smul.addr %s259, 8
      %s261 = scalar_lea.vmem %s5, %s260
      %s262 = smul.u32 3, %s18
      %p263 = scmp.lt.s32.totalorder %s18, 1
      %s264 = scalar_select %p263, %s18, 1
      %s265 = smul.addr %s264, 3
      %s266 = smul.addr %s265, 8
      %s267 = scalar_lea.vmem %s6, %s266
      %v269 = vld [vmem:[%s255] sm:$0xf]
      %v270 = vld [vmem:[%s255 + $0x4] sm:$0xf]
      %v271 = vld [vmem:[%s255 + $0x8] sm:$0xf]
      %v272 = vld [vmem:[%s1] sm:$0xf]
      %v273 = vld [vmem:[%s1 + $0x4] sm:$0xf]
      %v274 = vld [vmem:[%s1 + $0x8] sm:$0xf]
      %v275 = vld [vmem:[%s1 + $0xc] sm:$0xf]
      %v276 = vld [vmem:[%s2] sm:$0x1]
      %v278 = vperm.slane %v276, 0
      %v283 = vunpack.c.l.b16 %v269
      %v284 = vunpack.c.l.b16 %v270
      %v285 = vunpack.c.l.b16 %v271
      %v286 = vpack.c.b16 %v284, %v283
      %v287 = vpack.c.b16 %v285, %v285
      %v292 = vunpack.c.l.b16 %v272
      %v293 = vunpack.c.l.b16 %v273
      %v294 = vunpack.c.l.b16 %v274
      %v295 = vunpack.c.l.b16 %v275
      %v296 = vpack.c.b16 %v293, %v292
      %v297 = vpack.c.b16 %v295, %v294
      %vm300 = vcmask 261120
      %v302 = vsel %vm300, %v286, 0
      %v305 = vsel %vm300, %v287, 0
      %307 = vmatpush.bf16.msra.mxu0 0
      %308 = vmatpush.bf16.msra.mxu0 0
      %309 = vmatpush.bf16.msra.mxu0 0
      %310 = vmatpush.bf16.msra.mxu0 0
      %311 = vmatpush.bf16.msra.mxu0 0
      %312 = vmatpush.bf16.msra.mxu0 0
      %313 = vmatpush.bf16.msra.mxu0 %v297
      %314 = vmatpush.bf16.msra.mxu0 %v296
      %315 = vmatmul.bf16.gmra.mxu0 %v302
      %v316 = vpop.f32.mrf.mxu0
      %v317 = vadd.f32 %v278, %v316
      %v318 = vpop.f32.mrf.mxu0
      %v319 = vadd.f32 %v278, %v318
      %320 = vmatmul.bf16.gmra.mxu0 %v305
      %v321 = vpop.f32.mrf.mxu0
      %v322 = vadd.f32 %v278, %v321
      %v323 = vpop.f32.mrf.mxu0
      %324 = vdwg.mxu0
      %v325 = vpack.c.bf16 %v317, %v317
      %v326 = vpack.c.bf16 %v319, %v319
      %v327 = vpack.c.bf16 %v322, %v322
      %vm328 = vcmask 781312
      %329 = vst.msk [vmem:[#allocation2] sm:$0xf] %vm328, %v325
      %330 = vst.msk [vmem:[#allocation2 + $0x4] sm:$0xf] %vm328, %v326
      %331 = vst.msk [vmem:[#allocation2 + $0x8] sm:$0xf] %vm328, %v327
      %vm332 = vcmask 257024
      %333 = vst.msk [vmem:[#allocation3] sm:$0xf] %vm332, 0
      %334 = vst.msk [vmem:[#allocation3 + $0x4] sm:$0xf] %vm332, 0
      %335 = vst.msk [vmem:[#allocation3 + $0x8] sm:$0xf] %vm332, 0
      %v336 = vld [vmem:[#allocation2] sm:$0xf]
      %v337 = vld [vmem:[#allocation2 + $0x4] sm:$0xf]
      %v338 = vld [vmem:[#allocation2 + $0x8] sm:$0x1]
      %342 = vrot.lane.b32.xlu0 %v336, 120
      %v343 = vpop.permute.xlu0 %342
      %344 = vrot.lane.b32.xlu0 %v337, 120
      %v345 = vpop.permute.xlu0 %344
      %346 = vrot.lane.b32.xlu0 %v338, 120
      %v347 = vpop.permute.xlu0 %346
      %348 = vrot.lane.b32.xlu0 %v336, 112
      %v349 = vpop.permute.xlu0 %348
      %350 = vrot.lane.b32.xlu0 %v337, 112
      %v351 = vpop.permute.xlu0 %350
      %352 = vrot.lane.b32.xlu0 %v338, 112
      %v353 = vpop.permute.xlu0 %352
      %354 = vrot.lane.b32.xlu0 %v336, 104
      %v355 = vpop.permute.xlu0 %354
      %356 = vrot.lane.b32.xlu0 %v337, 104
      %v357 = vpop.permute.xlu0 %356
      %358 = vrot.lane.b32.xlu0 %v338, 104
      %v359 = vpop.permute.xlu0 %358
      %v360 = vunpack.c.l.b16 %v336
      %v361 = vunpack.c.l.b16 %v337
      %v362 = vunpack.c.l.b16 %v338
      %v363 = vpack.c.b16 %v361, %v360
      %v364 = vpack.c.b16 %v362, %v362
      %365 = vrot.lane.b32.xlu0 %v363, 96
      %v366 = vpop.permute.xlu0 %365
      %367 = vrot.lane.b32.xlu0 %v364, 96
      %v368 = vpop.permute.xlu0 %367
      %vm369 = vcmask 64512
      %v371 = vsel %vm369, %v363, 0
      %v374 = vsel %vm369, %v364, 0
      %v377 = vsel %vm369, %v366, 0
      %v380 = vsel %vm369, %v368, 0
      %382 = vmatpush.bf16.xpose.msra.mxu0 0
      %383 = vmatpush.bf16.xpose.msra.mxu0 0
      %384 = vmatpush.bf16.xpose.msra.mxu0 0
      %385 = vmatpush.bf16.xpose.msra.mxu0 0
      %386 = vmatpush.bf16.xpose.msra.mxu0 0
      %387 = vmatpush.bf16.xpose.msra.mxu0 0
      %388 = vmatpush.bf16.xpose.msra.mxu0 %v380
      %389 = vmatpush.bf16.xpose.msra.mxu0 %v377
      %390 = vmatmul.bf16.gmra.mxu0 %v371
      %v391 = vpop.f32.mrf.mxu0
      %v392 = vadd.f32 0.0, %v391
      %v393 = vpop.f32.mrf.mxu0
      %v394 = vadd.f32 0.0, %v393
      %395 = vmatmul.bf16.gmra.mxu0 %v374
      %v396 = vpop.f32.mrf.mxu0
      %v397 = vadd.f32 0.0, %v396
      %v398 = vpop.f32.mrf.mxu0
      %399 = vdwg.mxu0
      %v400 = vunpack.c.l.b16 %v343
      %v401 = vunpack.c.l.b16 %v345
      %v402 = vunpack.c.l.b16 %v347
      %v403 = vpack.c.b16 %v401, %v400
      %v404 = vpack.c.b16 %v402, %v402
      %405 = vrot.lane.b32.xlu0 %v403, 96
      %v406 = vpop.permute.xlu0 %405
      %407 = vrot.lane.b32.xlu0 %v404, 96
      %v408 = vpop.permute.xlu0 %407
      %v410 = vsel %vm369, %v403, 0
      %v413 = vsel %vm369, %v404, 0
      %v416 = vsel %vm369, %v406, 0
      %v419 = vsel %vm369, %v408, 0
      %421 = vmatpush.bf16.xpose.msra.mxu0 0
      %422 = vmatpush.bf16.xpose.msra.mxu0 0
      %423 = vmatpush.bf16.xpose.msra.mxu0 0
      %424 = vmatpush.bf16.xpose.msra.mxu0 0
      %425 = vmatpush.bf16.xpose.msra.mxu0 0
      %426 = vmatpush.bf16.xpose.msra.mxu0 0
      %427 = vmatpush.bf16.xpose.msra.mxu0 %v419
      %428 = vmatpush.bf16.xpose.msra.mxu0 %v416
      %429 = vmatmul.bf16.gmra.mxu0 %v410
      %v430 = vpop.f32.mrf.mxu0
      %v431 = vadd.f32 0.0, %v430
      %v432 = vpop.f32.mrf.mxu0
      %v433 = vadd.f32 0.0, %v432
      %434 = vmatmul.bf16.gmra.mxu0 %v413
      %v435 = vpop.f32.mrf.mxu0
      %v436 = vadd.f32 0.0, %v435
      %v437 = vpop.f32.mrf.mxu0
      %438 = vdwg.mxu0
      %v439 = vunpack.c.l.b16 %v349
      %v440 = vunpack.c.l.b16 %v351
      %v441 = vunpack.c.l.b16 %v353
      %v442 = vpack.c.b16 %v440, %v439
      %v443 = vpack.c.b16 %v441, %v441
      %444 = vrot.lane.b32.xlu0 %v442, 96
      %v445 = vpop.permute.xlu0 %444
      %446 = vrot.lane.b32.xlu0 %v443, 96
      %v447 = vpop.permute.xlu0 %446
      %v449 = vsel %vm369, %v442, 0
      %v452 = vsel %vm369, %v443, 0
      %v455 = vsel %vm369, %v445, 0
      %v458 = vsel %vm369, %v447, 0
      %460 = vmatpush.bf16.xpose.msra.mxu0 0
      %461 = vmatpush.bf16.xpose.msra.mxu0 0
      %462 = vmatpush.bf16.xpose.msra.mxu0 0
      %463 = vmatpush.bf16.xpose.msra.mxu0 0
      %464 = vmatpush.bf16.xpose.msra.mxu0 0
      %465 = vmatpush.bf16.xpose.msra.mxu0 0
      %466 = vmatpush.bf16.xpose.msra.mxu0 %v458
      %467 = vmatpush.bf16.xpose.msra.mxu0 %v455
      %468 = vmatmul.bf16.gmra.mxu0 %v449
      %v469 = vpop.f32.mrf.mxu0
      %v470 = vadd.f32 0.0, %v469
      %v471 = vpop.f32.mrf.mxu0
      %v472 = vadd.f32 0.0, %v471
      %473 = vmatmul.bf16.gmra.mxu0 %v452
      %v474 = vpop.f32.mrf.mxu0
      %v475 = vadd.f32 0.0, %v474
      %v476 = vpop.f32.mrf.mxu0
      %477 = vdwg.mxu0
      %v478 = vunpack.c.l.b16 %v355
      %v479 = vunpack.c.l.b16 %v357
      %v480 = vunpack.c.l.b16 %v359
      %v481 = vpack.c.b16 %v479, %v478
      %v482 = vpack.c.b16 %v480, %v480
      %483 = vrot.lane.b32.xlu0 %v481, 96
      %v484 = vpop.permute.xlu0 %483
      %485 = vrot.lane.b32.xlu0 %v482, 96
      %v486 = vpop.permute.xlu0 %485
      %v488 = vsel %vm369, %v481, 0
      %v491 = vsel %vm369, %v482, 0
      %v494 = vsel %vm369, %v484, 0
      %v497 = vsel %vm369, %v486, 0
      %499 = vmatpush.bf16.xpose.msra.mxu0 0
      %500 = vmatpush.bf16.xpose.msra.mxu0 0
      %501 = vmatpush.bf16.xpose.msra.mxu0 0
      %502 = vmatpush.bf16.xpose.msra.mxu0 0
      %503 = vmatpush.bf16.xpose.msra.mxu0 0
      %504 = vmatpush.bf16.xpose.msra.mxu0 0
      %505 = vmatpush.bf16.xpose.msra.mxu0 %v497
      %506 = vmatpush.bf16.xpose.msra.mxu0 %v494
      %507 = vmatmul.bf16.gmra.mxu0 %v488
      %v508 = vpop.f32.mrf.mxu0
      %v509 = vadd.f32 0.0, %v508
      %v510 = vpop.f32.mrf.mxu0
      %v511 = vadd.f32 0.0, %v510
      %512 = vmatmul.bf16.gmra.mxu0 %v491
      %v513 = vpop.f32.mrf.mxu0
      %v514 = vadd.f32 0.0, %v513
      %v515 = vpop.f32.mrf.mxu0
      %516 = vdwg.mxu0
      %v517 = vmul.f32 %v392, 0.35355338
      %v518 = vmul.f32 %v394, 0.35355338
      %v519 = vmul.f32 %v397, 0.35355338
      %v520 = vmul.f32 %v431, 0.35355338
      %v521 = vmul.f32 %v433, 0.35355338
      %v522 = vmul.f32 %v436, 0.35355338
      %v523 = vmul.f32 %v470, 0.35355338
      %v524 = vmul.f32 %v472, 0.35355338
      %v525 = vmul.f32 %v475, 0.35355338
      %v526 = vmul.f32 %v509, 0.35355338
      %v527 = vmul.f32 %v511, 0.35355338
      %v528 = vmul.f32 %v514, 0.35355338
      %vm529 = vcmask 138240
      %v530 = vsel %vm529, %v517, -inf
      %531 = vmax.xlane.f32.xlu0 %v530
      %v532 = vpop.xlane.xlu0 %531
      %v533 = vsel %vm529, %v518, -inf
      %534 = vmax.xlane.f32.xlu0 %v533
      %v535 = vpop.xlane.xlu0 %534
      %vm536 = vcmask 131072
      %v537 = vsel %vm536, %v519, -inf
      %538 = vmax.xlane.f32.xlu0 %v537
      %v539 = vpop.xlane.xlu0 %538
      %v540 = vsel %vm529, %v520, -inf
      %541 = vmax.xlane.f32.xlu0 %v540
      %v542 = vpop.xlane.xlu0 %541
      %v543 = vsel %vm529, %v521, -inf
      %544 = vmax.xlane.f32.xlu0 %v543
      %v545 = vpop.xlane.xlu0 %544
      %v546 = vsel %vm536, %v522, -inf
      %547 = vmax.xlane.f32.xlu0 %v546
      %v548 = vpop.xlane.xlu0 %547
      %v549 = vsel %vm529, %v523, -inf
      %550 = vmax.xlane.f32.xlu0 %v549
      %v551 = vpop.xlane.xlu0 %550
      %v552 = vsel %vm529, %v524, -inf
      %553 = vmax.xlane.f32.xlu0 %v552
      %v554 = vpop.xlane.xlu0 %553
      %v555 = vsel %vm536, %v525, -inf
      %556 = vmax.xlane.f32.xlu0 %v555
      %v557 = vpop.xlane.xlu0 %556
      %v558 = vsel %vm529, %v526, -inf
      %559 = vmax.xlane.f32.xlu0 %v558
      %v560 = vpop.xlane.xlu0 %559
      %v561 = vsel %vm529, %v527, -inf
      %562 = vmax.xlane.f32.xlu0 %v561
      %v563 = vpop.xlane.xlu0 %562
      %v564 = vsel %vm536, %v528, -inf
      %565 = vmax.xlane.f32.xlu0 %v564
      %v566 = vpop.xlane.xlu0 %565
      %v567 = vsub.f32 %v517, %v532
      %v568 = vsub.f32 %v518, %v535
      %v569 = vsub.f32 %v519, %v539
      %v570 = vsub.f32 %v520, %v542
      %v571 = vsub.f32 %v521, %v545
      %v572 = vsub.f32 %v522, %v548
      %v573 = vsub.f32 %v523, %v551
      %v574 = vsub.f32 %v524, %v554
      %v575 = vsub.f32 %v525, %v557
      %v576 = vsub.f32 %v526, %v560
      %v577 = vsub.f32 %v527, %v563
      %v578 = vsub.f32 %v528, %v566
      %v579 = vmul.f32 %v567, 1.442695
      %v580 = vpow.pop %v579
      %v581 = vmul.f32 %v568, 1.442695
      %v582 = vpow.pop %v581
      %v583 = vmul.f32 %v569, 1.442695
      %v584 = vpow.pop %v583
      %v585 = vmul.f32 %v570, 1.442695
      %v586 = vpow.pop %v585
      %v587 = vmul.f32 %v571, 1.442695
      %v588 = vpow.pop %v587
      %v589 = vmul.f32 %v572, 1.442695
      %v590 = vpow.pop %v589
      %v591 = vmul.f32 %v573, 1.442695
      %v592 = vpow.pop %v591
      %v593 = vmul.f32 %v574, 1.442695
      %v594 = vpow.pop %v593
      %v595 = vmul.f32 %v575, 1.442695
      %v596 = vpow.pop %v595
      %v597 = vmul.f32 %v576, 1.442695
      %v598 = vpow.pop %v597
      %v599 = vmul.f32 %v577, 1.442695
      %v600 = vpow.pop %v599
      %v601 = vmul.f32 %v578, 1.442695
      %v602 = vpow.pop %v601
      %v603 = vsel %vm529, %v580, 0.0
      %604 = vadd.xlane.f32.xlu0 %v603
      %v605 = vpop.xlane.xlu0 %604
      %v606 = vsel %vm529, %v582, 0.0
      %607 = vadd.xlane.f32.xlu0 %v606
      %v608 = vpop.xlane.xlu0 %607
      %v609 = vsel %vm536, %v584, 0.0
      %610 = vadd.xlane.f32.xlu0 %v609
      %v611 = vpop.xlane.xlu0 %610
      %v612 = vsel %vm529, %v586, 0.0
      %613 = vadd.xlane.f32.xlu0 %v612
      %v614 = vpop.xlane.xlu0 %613
      %v615 = vsel %vm529, %v588, 0.0
      %616 = vadd.xlane.f32.xlu0 %v615
      %v617 = vpop.xlane.xlu0 %616
      %v618 = vsel %vm536, %v590, 0.0
      %619 = vadd.xlane.f32.xlu0 %v618
      %v620 = vpop.xlane.xlu0 %619
      %v621 = vsel %vm529, %v592, 0.0
      %622 = vadd.xlane.f32.xlu0 %v621
      %v623 = vpop.xlane.xlu0 %622
      %v624 = vsel %vm529, %v594, 0.0
      %625 = vadd.xlane.f32.xlu0 %v624
      %v626 = vpop.xlane.xlu0 %625
      %v627 = vsel %vm536, %v596, 0.0
      %628 = vadd.xlane.f32.xlu0 %v627
      %v629 = vpop.xlane.xlu0 %628
      %v630 = vsel %vm529, %v598, 0.0
      %631 = vadd.xlane.f32.xlu0 %v630
      %v632 = vpop.xlane.xlu0 %631
      %v633 = vsel %vm529, %v600, 0.0
      %634 = vadd.xlane.f32.xlu0 %v633
      %v635 = vpop.xlane.xlu0 %634
      %v636 = vsel %vm536, %v602, 0.0
      %637 = vadd.xlane.f32.xlu0 %v636
      %v638 = vpop.xlane.xlu0 %637
      %v639 = vrcp.pop %v605
      %v640 = vmul.f32 %v605, %v639
      %v641 = vsub.f32 1.0, %v640
      %v642 = vmul.f32 %v639, %v641
      %v643 = vadd.f32 %v639, %v642
      %vm644 = vweird.f32 %v605
      %vm645 = vweird.f32 %v639
      %vm646 = vmor %vm644, %vm645
      %v647 = vsel %vm646, %v639, %v643
      %v648 = vand.u32 2147483647, %v605
      %vm649 = vcmp.eq.f32.partialorder %v648, 8.507059e+37
      %v650 = vand.u32 %v605, 2147483648
      %v651 = vor.u32 1.1754944e-38, %v650
      %v652 = vsel %vm649, %v651, %v647
      %v653 = vmul.f32 %v580, %v652
      %v654 = vrcp.pop %v608
      %v655 = vmul.f32 %v608, %v654
      %v656 = vsub.f32 1.0, %v655
      %v657 = vmul.f32 %v654, %v656
      %v658 = vadd.f32 %v654, %v657
      %vm659 = vweird.f32 %v608
      %vm660 = vweird.f32 %v654
      %vm661 = vmor %vm659, %vm660
      %v662 = vsel %vm661, %v654, %v658
      %v663 = vand.u32 2147483647, %v608
      %vm664 = vcmp.eq.f32.partialorder %v663, 8.507059e+37
      %v665 = vand.u32 %v608, 2147483648
      %v666 = vor.u32 1.1754944e-38, %v665
      %v667 = vsel %vm664, %v666, %v662
      %v668 = vmul.f32 %v582, %v667
      %v669 = vrcp.pop %v611
      %v670 = vmul.f32 %v611, %v669
      %v671 = vsub.f32 1.0, %v670
      %v672 = vmul.f32 %v669, %v671
      %v673 = vadd.f32 %v669, %v672
      %vm674 = vweird.f32 %v611
      %vm675 = vweird.f32 %v669
      %vm676 = vmor %vm674, %vm675
      %v677 = vsel %vm676, %v669, %v673
      %v678 = vand.u32 2147483647, %v611
      %vm679 = vcmp.eq.f32.partialorder %v678, 8.507059e+37
      %v680 = vand.u32 %v611, 2147483648
      %v681 = vor.u32 1.1754944e-38, %v680
      %v682 = vsel %vm679, %v681, %v677
      %v683 = vmul.f32 %v584, %v682
      %v684 = vrcp.pop %v614
      %v685 = vmul.f32 %v614, %v684
      %v686 = vsub.f32 1.0, %v685
      %v687 = vmul.f32 %v684, %v686
      %v688 = vadd.f32 %v684, %v687
      %vm689 = vweird.f32 %v614
      %vm690 = vweird.f32 %v684
      %vm691 = vmor %vm689, %vm690
      %v692 = vsel %vm691, %v684, %v688
      %v693 = vand.u32 2147483647, %v614
      %vm694 = vcmp.eq.f32.partialorder %v693, 8.507059e+37
      %v695 = vand.u32 %v614, 2147483648
      %v696 = vor.u32 1.1754944e-38, %v695
      %v697 = vsel %vm694, %v696, %v692
      %v698 = vmul.f32 %v586, %v697
      %v699 = vrcp.pop %v617
      %v700 = vmul.f32 %v617, %v699
      %v701 = vsub.f32 1.0, %v700
      %v702 = vmul.f32 %v699, %v701
      %v703 = vadd.f32 %v699, %v702
      %vm704 = vweird.f32 %v617
      %vm705 = vweird.f32 %v699
      %vm706 = vmor %vm704, %vm705
      %v707 = vsel %vm706, %v699, %v703
      %v708 = vand.u32 2147483647, %v617
      %vm709 = vcmp.eq.f32.partialorder %v708, 8.507059e+37
      %v710 = vand.u32 %v617, 2147483648
      %v711 = vor.u32 1.1754944e-38, %v710
      %v712 = vsel %vm709, %v711, %v707
      %v713 = vmul.f32 %v588, %v712
      %v714 = vrcp.pop %v620
      %v715 = vmul.f32 %v620, %v714
      %v716 = vsub.f32 1.0, %v715
      %v717 = vmul.f32 %v714, %v716
      %v718 = vadd.f32 %v714, %v717
      %vm719 = vweird.f32 %v620
      %vm720 = vweird.f32 %v714
      %vm721 = vmor %vm719, %vm720
      %v722 = vsel %vm721, %v714, %v718
      %v723 = vand.u32 2147483647, %v620
      %vm724 = vcmp.eq.f32.partialorder %v723, 8.507059e+37
      %v725 = vand.u32 %v620, 2147483648
      %v726 = vor.u32 1.1754944e-38, %v725
      %v727 = vsel %vm724, %v726, %v722
      %v728 = vmul.f32 %v590, %v727
      %v729 = vrcp.pop %v623
      %v730 = vmul.f32 %v623, %v729
      %v731 = vsub.f32 1.0, %v730
      %v732 = vmul.f32 %v729, %v731
      %v733 = vadd.f32 %v729, %v732
      %vm734 = vweird.f32 %v623
      %vm735 = vweird.f32 %v729
      %vm736 = vmor %vm734, %vm735
      %v737 = vsel %vm736, %v729, %v733
      %v738 = vand.u32 2147483647, %v623
      %vm739 = vcmp.eq.f32.partialorder %v738, 8.507059e+37
      %v740 = vand.u32 %v623, 2147483648
      %v741 = vor.u32 1.1754944e-38, %v740
      %v742 = vsel %vm739, %v741, %v737
      %v743 = vmul.f32 %v592, %v742
      %v744 = vrcp.pop %v626
      %v745 = vmul.f32 %v626, %v744
      %v746 = vsub.f32 1.0, %v745
      %v747 = vmul.f32 %v744, %v746
      %v748 = vadd.f32 %v744, %v747
      %vm749 = vweird.f32 %v626
      %vm750 = vweird.f32 %v744
      %vm751 = vmor %vm749, %vm750
      %v752 = vsel %vm751, %v744, %v748
      %v753 = vand.u32 2147483647, %v626
      %vm754 = vcmp.eq.f32.partialorder %v753, 8.507059e+37
      %v755 = vand.u32 %v626, 2147483648
      %v756 = vor.u32 1.1754944e-38, %v755
      %v757 = vsel %vm754, %v756, %v752
      %v758 = vmul.f32 %v594, %v757
      %v759 = vrcp.pop %v629
      %v760 = vmul.f32 %v629, %v759
      %v761 = vsub.f32 1.0, %v760
      %v762 = vmul.f32 %v759, %v761
      %v763 = vadd.f32 %v759, %v762
      %vm764 = vweird.f32 %v629
      %vm765 = vweird.f32 %v759
      %vm766 = vmor %vm764, %vm765
      %v767 = vsel %vm766, %v759, %v763
      %v768 = vand.u32 2147483647, %v629
      %vm769 = vcmp.eq.f32.partialorder %v768, 8.507059e+37
      %v770 = vand.u32 %v629, 2147483648
      %v771 = vor.u32 1.1754944e-38, %v770
      %v772 = vsel %vm769, %v771, %v767
      %v773 = vmul.f32 %v596, %v772
      %v774 = vrcp.pop %v632
      %v775 = vmul.f32 %v632, %v774
      %v776 = vsub.f32 1.0, %v775
      %v777 = vmul.f32 %v774, %v776
      %v778 = vadd.f32 %v774, %v777
      %vm779 = vweird.f32 %v632
      %vm780 = vweird.f32 %v774
      %vm781 = vmor %vm779, %vm780
      %v782 = vsel %vm781, %v774, %v778
      %v783 = vand.u32 2147483647, %v632
      %vm784 = vcmp.eq.f32.partialorder %v783, 8.507059e+37
      %v785 = vand.u32 %v632, 2147483648
      %v786 = vor.u32 1.1754944e-38, %v785
      %v787 = vsel %vm784, %v786, %v782
      %v788 = vmul.f32 %v598, %v787
      %v789 = vrcp.pop %v635
      %v790 = vmul.f32 %v635, %v789
      %v791 = vsub.f32 1.0, %v790
      %v792 = vmul.f32 %v789, %v791
      %v793 = vadd.f32 %v789, %v792
      %vm794 = vweird.f32 %v635
      %vm795 = vweird.f32 %v789
      %vm796 = vmor %vm794, %vm795
      %v797 = vsel %vm796, %v789, %v793
      %v798 = vand.u32 2147483647, %v635
      %vm799 = vcmp.eq.f32.partialorder %v798, 8.507059e+37
      %v800 = vand.u32 %v635, 2147483648
      %v801 = vor.u32 1.1754944e-38, %v800
      %v802 = vsel %vm799, %v801, %v797
      %v803 = vmul.f32 %v600, %v802
      %v804 = vrcp.pop %v638
      %v805 = vmul.f32 %v638, %v804
      %v806 = vsub.f32 1.0, %v805
      %v807 = vmul.f32 %v804, %v806
      %v808 = vadd.f32 %v804, %v807
      %vm809 = vweird.f32 %v638
      %vm810 = vweird.f32 %v804
      %vm811 = vmor %vm809, %vm810
      %v812 = vsel %vm811, %v804, %v808
      %v813 = vand.u32 2147483647, %v638
      %vm814 = vcmp.eq.f32.partialorder %v813, 8.507059e+37
      %v815 = vand.u32 %v638, 2147483648
      %v816 = vor.u32 1.1754944e-38, %v815
      %v817 = vsel %vm814, %v816, %v812
      %v818 = vmul.f32 %v602, %v817
      %v819 = vsel %vm529, %v653, 0.0
      %v820 = vsel %vm529, %v698, 0.0
      %v821 = vadd.f32 %v819, %v820
      %v822 = vsel %vm529, %v743, 0.0
      %v823 = vadd.f32 %v821, %v822
      %v824 = vsel %vm529, %v788, 0.0
      %v825 = vadd.f32 %v823, %v824
      %v826 = vsel %vm529, %v668, 0.0
      %v827 = vsel %vm529, %v713, 0.0
      %v828 = vadd.f32 %v826, %v827
      %v829 = vsel %vm529, %v758, 0.0
      %v830 = vadd.f32 %v828, %v829
      %v831 = vsel %vm529, %v803, 0.0
      %v832 = vadd.f32 %v830, %v831
      %v833 = vsel %vm536, %v683, 0.0
      %v834 = vsel %vm536, %v728, 0.0
      %v835 = vadd.f32 %v833, %v834
      %v836 = vsel %vm536, %v773, 0.0
      %v837 = vadd.f32 %v835, %v836
      %v838 = vsel %vm536, %v818, 0.0
      %v839 = vadd.f32 %v837, %v838
      %v840 = vrcp.pop 4.0
      %v841 = vmul.f32 4.0, %v840
      %v842 = vsub.f32 1.0, %v841
      %v843 = vmul.f32 %v840, %v842
      %v844 = vadd.f32 %v840, %v843
      %vm845 = vweird.f32 %v840
      %v846 = vsel %vm845, %v840, %v844
      %v847 = vmul.f32 %v825, %v846
      %v848 = vmul.f32 %v832, %v846
      %v849 = vmul.f32 %v839, %v846
      %850 = vst.msk [vmem:[%s267] sm:$0xff] %vm529, %v847
      %851 = vst.msk [vmem:[%s267 + $0x8] sm:$0xff] %vm529, %v848
      %852 = vst.msk [vmem:[%s267 + $0x10] sm:$0x1] %vm536, %v849
      %v853 = vpack.c.bf16 %v653, %v653
      %v854 = vpack.c.bf16 %v668, %v668
      %v855 = vpack.c.bf16 %v683, %v683
      %v856 = vpack.c.bf16 %v698, %v698
      %v857 = vpack.c.bf16 %v713, %v713
      %v858 = vpack.c.bf16 %v728, %v728
      %v859 = vpack.c.bf16 %v743, %v743
      %v860 = vpack.c.bf16 %v758, %v758
      %v861 = vpack.c.bf16 %v773, %v773
      %v862 = vpack.c.bf16 %v788, %v788
      %v863 = vpack.c.bf16 %v803, %v803
      %v864 = vpack.c.bf16 %v818, %v818
      %v868 = vunpack.c.l.b16 %v853
      %v869 = vunpack.c.l.b16 %v854
      %v870 = vunpack.c.l.b16 %v855
      %v871 = vpack.c.b16 %v869, %v868
      %v872 = vpack.c.b16 %v870, %v870
      %873 = vrot.lane.b32.xlu0 %v363, 64
      %v874 = vpop.permute.xlu0 %873
      %875 = vrot.lane.b32.xlu0 %v364, 64
      %v876 = vpop.permute.xlu0 %875
      %v879 = vsel %vm529, %v871, 0
      %v882 = vsel %vm529, %v872, 0
      %vm884 = vcmask 1040384
      %v885 = vsel 0, 4294967295, 65535
      %v886 = vsel %vm884, %v885, 0
      %v888 = vand.u32 %v876, %v886
      %890 = vmatpush.bf16.msra.mxu0 0
      %891 = vmatpush.bf16.msra.mxu0 0
      %892 = vmatpush.bf16.msra.mxu0 0
      %893 = vmatpush.bf16.msra.mxu0 0
      %894 = vmatpush.bf16.msra.mxu0 0
      %895 = vmatpush.bf16.msra.mxu0 0
      %896 = vmatpush.bf16.msra.mxu0 %v888
      %897 = vmatpush.bf16.msra.mxu0 %v874
      %898 = vmatmul.bf16.gmra.mxu0 %v879
      %v899 = vpop.f32.mrf.mxu0
      %v900 = vadd.f32 0.0, %v899
      %v901 = vpop.f32.mrf.mxu0
      %v902 = vadd.f32 0.0, %v901
      %903 = vmatmul.bf16.gmra.mxu0 %v882
      %v904 = vpop.f32.mrf.mxu0
      %v905 = vadd.f32 0.0, %v904
      %v906 = vpop.f32.mrf.mxu0
      %907 = vdwg.mxu0
      %v911 = vunpack.c.l.b16 %v856
      %v912 = vunpack.c.l.b16 %v857
      %v913 = vunpack.c.l.b16 %v858
      %v914 = vpack.c.b16 %v912, %v911
      %v915 = vpack.c.b16 %v913, %v913
      %916 = vrot.lane.b32.xlu0 %v403, 64
      %v917 = vpop.permute.xlu0 %916
      %918 = vrot.lane.b32.xlu0 %v404, 64
      %v919 = vpop.permute.xlu0 %918
      %v922 = vsel %vm529, %v914, 0
      %v925 = vsel %vm529, %v915, 0
      %v928 = vand.u32 %v919, %v886
      %930 = vmatpush.bf16.msra.mxu0 0
      %931 = vmatpush.bf16.msra.mxu0 0
      %932 = vmatpush.bf16.msra.mxu0 0
      %933 = vmatpush.bf16.msra.mxu0 0
      %934 = vmatpush.bf16.msra.mxu0 0
      %935 = vmatpush.bf16.msra.mxu0 0
      %936 = vmatpush.bf16.msra.mxu0 %v928
      %937 = vmatpush.bf16.msra.mxu0 %v917
      %938 = vmatmul.bf16.gmra.mxu0 %v922
      %v939 = vpop.f32.mrf.mxu0
      %v940 = vadd.f32 0.0, %v939
      %v941 = vpop.f32.mrf.mxu0
      %v942 = vadd.f32 0.0, %v941
      %943 = vmatmul.bf16.gmra.mxu0 %v925
      %v944 = vpop.f32.mrf.mxu0
      %v945 = vadd.f32 0.0, %v944
      %v946 = vpop.f32.mrf.mxu0
      %947 = vdwg.mxu0
      %v951 = vunpack.c.l.b16 %v859
      %v952 = vunpack.c.l.b16 %v860
      %v953 = vunpack.c.l.b16 %v861
      %v954 = vpack.c.b16 %v952, %v951
      %v955 = vpack.c.b16 %v953, %v953
      %956 = vrot.lane.b32.xlu0 %v442, 64
      %v957 = vpop.permute.xlu0 %956
      %958 = vrot.lane.b32.xlu0 %v443, 64
      %v959 = vpop.permute.xlu0 %958
      %v962 = vsel %vm529, %v954, 0
      %v965 = vsel %vm529, %v955, 0
      %v968 = vand.u32 %v959, %v886
      %970 = vmatpush.bf16.msra.mxu0 0
      %971 = vmatpush.bf16.msra.mxu0 0
      %972 = vmatpush.bf16.msra.mxu0 0
      %973 = vmatpush.bf16.msra.mxu0 0
      %974 = vmatpush.bf16.msra.mxu0 0
      %975 = vmatpush.bf16.msra.mxu0 0
      %976 = vmatpush.bf16.msra.mxu0 %v968
      %977 = vmatpush.bf16.msra.mxu0 %v957
      %978 = vmatmul.bf16.gmra.mxu0 %v962
      %v979 = vpop.f32.mrf.mxu0
      %v980 = vadd.f32 0.0, %v979
      %v981 = vpop.f32.mrf.mxu0
      %v982 = vadd.f32 0.0, %v981
      %983 = vmatmul.bf16.gmra.mxu0 %v965
      %v984 = vpop.f32.mrf.mxu0
      %v985 = vadd.f32 0.0, %v984
      %v986 = vpop.f32.mrf.mxu0
      %987 = vdwg.mxu0
      %v991 = vunpack.c.l.b16 %v862
      %v992 = vunpack.c.l.b16 %v863
      %v993 = vunpack.c.l.b16 %v864
      %v994 = vpack.c.b16 %v992, %v991
      %v995 = vpack.c.b16 %v993, %v993
      %996 = vrot.lane.b32.xlu0 %v481, 64
      %v997 = vpop.permute.xlu0 %996
      %998 = vrot.lane.b32.xlu0 %v482, 64
      %v999 = vpop.permute.xlu0 %998
      %v1002 = vsel %vm529, %v994, 0
      %v1005 = vsel %vm529, %v995, 0
      %v1008 = vand.u32 %v999, %v886
      %1010 = vmatpush.bf16.msra.mxu0 0
      %1011 = vmatpush.bf16.msra.mxu0 0
      %1012 = vmatpush.bf16.msra.mxu0 0
      %1013 = vmatpush.bf16.msra.mxu0 0
      %1014 = vmatpush.bf16.msra.mxu0 0
      %1015 = vmatpush.bf16.msra.mxu0 0
      %1016 = vmatpush.bf16.msra.mxu0 %v1008
      %1017 = vmatpush.bf16.msra.mxu0 %v997
      %1018 = vmatmul.bf16.gmra.mxu0 %v1002
      %v1019 = vpop.f32.mrf.mxu0
      %v1020 = vadd.f32 0.0, %v1019
      %v1021 = vpop.f32.mrf.mxu0
      %v1022 = vadd.f32 0.0, %v1021
      %1023 = vmatmul.bf16.gmra.mxu0 %v1005
      %v1024 = vpop.f32.mrf.mxu0
      %v1025 = vadd.f32 0.0, %v1024
      %v1026 = vpop.f32.mrf.mxu0
      %1027 = vdwg.mxu0
      %1031 = vrot.lane.b32.xlu0 %v940, 8
      %v1032 = vpop.permute.xlu0 %1031
      %1033 = vrot.lane.b32.xlu0 %v942, 8
      %v1034 = vpop.permute.xlu0 %1033
      %1035 = vrot.lane.b32.xlu0 %v945, 8
      %v1036 = vpop.permute.xlu0 %1035
      %1043 = vrot.lane.b32.xlu0 %v980, 16
      %v1044 = vpop.permute.xlu0 %1043
      %1045 = vrot.lane.b32.xlu0 %v982, 16
      %v1046 = vpop.permute.xlu0 %1045
      %1047 = vrot.lane.b32.xlu0 %v985, 16
      %v1048 = vpop.permute.xlu0 %1047
      %1055 = vrot.lane.b32.xlu0 %v1020, 24
      %v1056 = vpop.permute.xlu0 %1055
      %1057 = vrot.lane.b32.xlu0 %v1022, 24
      %v1058 = vpop.permute.xlu0 %1057
      %1059 = vrot.lane.b32.xlu0 %v1025, 24
      %v1060 = vpop.permute.xlu0 %1059
      %v1064 = vsel %vm369, %v900, %v1032
      %v1065 = vsel %vm369, %v902, %v1034
      %v1066 = vsel %vm369, %v905, %v1036
      %vm1067 = vcmask 130048
      %v1068 = vsel %vm1067, %v1064, %v1044
      %v1069 = vsel %vm1067, %v1065, %v1046
      %v1070 = vsel %vm1067, %v1066, %v1048
      %vm1071 = vcmask 195584
      %v1072 = vsel %vm1071, %v1068, %v1056
      %v1073 = vsel %vm1071, %v1069, %v1058
      %v1074 = vsel %vm1071, %v1070, %v1060
      %v1075 = vpack.c.bf16 %v1072, %v1072
      %v1076 = vpack.c.bf16 %v1073, %v1073
      %v1077 = vpack.c.bf16 %v1074, %v1074
      %1078 = vst.msk [vmem:[#allocation3] sm:$0xf] %vm332, %v1075
      %1079 = vst.msk [vmem:[#allocation3 + $0x4] sm:$0xf] %vm332, %v1076
      %vm1080 = vcmask 253952
      %vm1081 = vsmask.f32 256
      %vm1082 = vmand %vm1080, %vm1081
      %v1083 = vld [vmem:[#allocation3 + $0x8] sm:$0x1]
      %v1084 = vsel %vm1082, %v1077, %v1083
      %1085 = vst [vmem:[#allocation3 + $0x8] sm:$0x1] %v1084
      %v1086 = vld [vmem:[#allocation3] sm:$0xf]
      %v1087 = vld [vmem:[#allocation3 + $0x4] sm:$0xf]
      %v1088 = vld [vmem:[#allocation3 + $0x8] sm:$0xf]
      %v1089 = vld [vmem:[%s3] sm:$0xf]
      %v1090 = vld [vmem:[%s3 + $0x4] sm:$0xf]
      %v1091 = vld [vmem:[%s3 + $0x8] sm:$0xf]
      %v1092 = vld [vmem:[%s3 + $0xc] sm:$0xf]
      %v1093 = vld [vmem:[%s4] sm:$0x1]
      %v1095 = vperm.slane %v1093, 0
      %v1100 = vunpack.c.l.b16 %v1086
      %v1101 = vunpack.c.l.b16 %v1087
      %v1102 = vunpack.c.l.b16 %v1088
      %v1103 = vpack.c.b16 %v1101, %v1100
      %v1104 = vpack.c.b16 %v1102, %v1102
      %v1109 = vunpack.c.l.b16 %v1089
      %v1110 = vunpack.c.l.b16 %v1090
      %v1111 = vunpack.c.l.b16 %v1091
      %v1112 = vunpack.c.l.b16 %v1092
      %v1113 = vpack.c.b16 %v1110, %v1109
      %v1114 = vpack.c.b16 %v1112, %v1111
      %v1118 = vsel %vm300, %v1103, 0
      %v1121 = vsel %vm300, %v1104, 0
      %1123 = vmatpush.bf16.msra.mxu0 0
      %1124 = vmatpush.bf16.msra.mxu0 0
      %1125 = vmatpush.bf16.msra.mxu0 0
      %1126 = vmatpush.bf16.msra.mxu0 0
      %1127 = vmatpush.bf16.msra.mxu0 0
      %1128 = vmatpush.bf16.msra.mxu0 0
      %1129 = vmatpush.bf16.msra.mxu0 %v1114
      %1130 = vmatpush.bf16.msra.mxu0 %v1113
      %1131 = vmatmul.bf16.gmra.mxu0 %v1118
      %v1132 = vpop.f32.mrf.mxu0
      %v1133 = vadd.f32 %v1095, %v1132
      %v1134 = vpop.f32.mrf.mxu0
      %v1135 = vadd.f32 %v1095, %v1134
      %1136 = vmatmul.bf16.gmra.mxu0 %v1121
      %v1137 = vpop.f32.mrf.mxu0
      %v1138 = vadd.f32 %v1095, %v1137
      %v1139 = vpop.f32.mrf.mxu0
      %1140 = vdwg.mxu0
      %1141 = vst.msk [vmem:[%s261] sm:$0xff] %vm300, %v1133
      %1142 = vst.msk [vmem:[%s261 + $0x8] sm:$0xff] %vm300, %v1135
      %1143 = vst.msk [vmem:[%s261 + $0x10] sm:$0xff] %vm300, %v1138
      %s1144 = smul.u32 3, %s18
      %p1145 = scmp.lt.s32.totalorder %s1144, 5
      %s1146 = scalar_select %p1145, %s1144, 5
      %s1147 = smul.addr %s1146, 8
      %s1148 = scalar_lea.vmem %s5, %s1147
      %p1149 = scmp.lt.s32.totalorder %s18, 1
      %s1150 = scalar_select %p1149, %s18, 1
      %s1151 = smul.addr %s1150, 3
      %s1152 = smul.addr %s1151, 8
      %s1153 = scalar_lea.vmem %s6, %s1152
      // Predicated region
      $region41: #{tpu_custom_call.1} parent=39 // pred_check
        %p1154 = pneg %p146
      $region42: #{tpu_custom_call.1} parent=39 // pred_check_branch
        %1156 = sbr.rel (%p1154) target = $region44
      $region43: #{tpu_custom_call.1} parent=39 // pred_region
        %s1157 = smul.u32 3, %s18
      $region44: #{tpu_custom_call.1} parent=39 // pred_fallthru
        _
      // Predicated region
      $region45: #{tpu_custom_call.1} parent=39 // pred_check
        %p1158 = pneg %p172
      $region46: #{tpu_custom_call.1} parent=39 // pred_check_branch
        %1160 = sbr.rel (%p1158) target = $region48
      $region47: #{tpu_custom_call.1} parent=39 // pred_region
        _
      $region48: #{tpu_custom_call.1} parent=39 // pred_fallthru
        _
    $region40: #{tpu_custom_call.1} parent=5 // pred_fallthru
      _
    %p1161 = scmp.le.s32.totalorder 2, %s13
    // Predicated region
    $region49: #{tpu_custom_call.1} parent=5 // pred_check
      %p1162 = pneg %p1161
    $region50: #{tpu_custom_call.1} parent=5 // pred_check_branch
      %1164 = sbr.rel (%p1162) target = $region52
    $region51: #{tpu_custom_call.1} parent=5 // pred_region
      %s1165 = ssub.s32 %s13, 2
      // Predicated region
      $region53: #{tpu_custom_call.1} parent=51 // pred_check
        %p1166 = pneg %p152
      $region54: #{tpu_custom_call.1} parent=51 // pred_check_branch
        %1168 = sbr.rel (%p1166) target = $region56
      $region55: #{tpu_custom_call.1} parent=51 // pred_region
        %s1169 = smul.u32 3, %s19
        %p1170 = scmp.lt.s32.totalorder %s1169, 5
        %s1171 = scalar_select %p1170, %s1169, 5
        %s1172 = smul.addr %s1171, 8
        %s1173 = scalar_lea.vmem %s5, %s1172
      $region56: #{tpu_custom_call.1} parent=51 // pred_fallthru
        _
      // Predicated region
      $region57: #{tpu_custom_call.1} parent=51 // pred_check
        %p1174 = pneg %p178
      $region58: #{tpu_custom_call.1} parent=51 // pred_check_branch
        %1176 = sbr.rel (%p1174) target = $region60
      $region59: #{tpu_custom_call.1} parent=51 // pred_region
        %p1177 = scmp.lt.s32.totalorder %s19, 1
        %s1178 = scalar_select %p1177, %s19, 1
        %s1179 = smul.addr %s1178, 3
        %s1180 = smul.addr %s1179, 8
        %s1181 = scalar_lea.vmem %s6, %s1180
      $region60: #{tpu_custom_call.1} parent=51 // pred_fallthru
        _
    $region52: #{tpu_custom_call.1} parent=5 // pred_fallthru
      _
  $region6: #{tpu_custom_call.1} parent=0 // loop_footer
    %s17 = sadd.s32 1, %s13
  $region7: #{tpu_custom_call.1} parent=0 // loop_footer_branch
    %12 = sbr.rel target = $region3
  $region8: #{tpu_custom_call.1} parent=0 // loop_exit
    _

</llo_original>
